<compile_context>
chip_gen: v6e
topology: v6e:2x2x1
jax: 0.10.0
libtpu: 0.0.40
codegen_flags: <defaults>
</compile_context>

<pallas_src>
import functools

import jax
import jax.numpy as jnp
from jax import lax
from jax.experimental import pallas as pl
from jax.experimental.pallas import tpu as pltpu

LN_EPS = 1e-5          # PyTorch nn.LayerNorm default
LANE = 128
SUBLANE = 8
MIB = 1024 * 1024
MAX_E_TILE = 2048      # out block is E_TILE x 128 f32 -> 1 MiB at 2048
MAX_T_TILE = 256       # fills 256-deep v6e/v7x MXU contraction


def _round_up(x, m):
    return (x + m - 1) // m * m


def _cdiv(a, b):
    return (a + b - 1) // b


def _gelu_exact(x):
    # nn.GELU() default ("none") = exact erf formulation.
    return 0.5 * x * (1.0 + lax.erf(x * 0.7071067811865476))


# ---------------------------------------------------------------------------
# Kernel A: one-hot MXU gather + Linear(3D -> D) + exact GELU   (grid over T tiles)
# ---------------------------------------------------------------------------
def _gather_linear_kernel(tri_ref, fe_ref, w_ref, b_ref, h_ref):
    # tri_ref : VMEM [T_TILE, 3]   int32  pre-clipped triangle indices
    # fe_ref  : VMEM [E_pad, Dk]   bf16   lane-padded edge features (resident)
    # w_ref   : VMEM [3, Dk, Dp]   bf16   per-slot Linear weights (zero padded)
    # b_ref   : VMEM [1, Dp]       f32    bias (zero padded)
    # h_ref   : VMEM [T_TILE, Dp]  bf16   output tile (lane Dp-1 = fused count column)
    t_tile, dp = h_ref.shape
    e_pad = fe_ref.shape[0]

    tri = tri_ref[...]                                         # [T_TILE, 3]
    fe = fe_ref[...]                                           # [E_pad, Dk] bf16
    e_iota = lax.broadcasted_iota(jnp.int32, (t_tile, e_pad), 1)

    # Gather + Linear entirely on the MXU: for each triangle slot j,
    #   rows_j = onehot_j @ f_edge     (exact row selection, bf16 operands)
    #   acc   += rows_j @ W_j          (f32 accumulation)
    acc = None
    for j in range(3):
        onehot_j = (tri[:, j:j + 1] == e_iota).astype(jnp.bfloat16)     # [T_TILE, E_pad]
        rows_j = jnp.dot(onehot_j, fe, preferred_element_type=jnp.float32)
        part = jnp.dot(rows_j.astype(jnp.bfloat16), w_ref[j],
                       preferred_element_type=jnp.float32)
        acc = part if acc is None else acc + part

    h = _gelu_exact(acc + b_ref[...])                          # pad lanes stay exactly 0

    # Fused count column: lane Dp-1 carries 1.0 so the scatter matmul in kernel B
    # also produces the per-edge counts (no second pass over the one-hot).
    lane = lax.broadcasted_iota(jnp.int32, h.shape, 1)
    h = jnp.where(lane == dp - 1, 1.0, h)
    h_ref[...] = h.astype(jnp.bfloat16)


# ---------------------------------------------------------------------------
# Kernel B: tiled scatter-mean (standard-orientation one-hot matmul) + LayerNorm
#           grid = (E tiles "parallel", T tiles "arbitrary"); accumulate into out_ref
# ---------------------------------------------------------------------------
def _scatter_ln_kernel(h_ref, dst_ref, gamma_ref, beta_ref, out_ref, *, d_model):
    # h_ref     : VMEM [T_TILE, Dp] bf16   GELU(Linear(...)) + count column
    # dst_ref   : VMEM [1, T_TILE]  int32  lane-major triangle[:, 2] (padded rows -> -1)
    # gamma/beta: VMEM [1, Dp]      f32    LayerNorm affine (zero padded)
    # out_ref   : VMEM [E_TILE, Dp] f32    scatter accumulator, resident across T axis
    e_tile, dp = out_ref.shape
    t_tile = h_ref.shape[0]
    ke = pl.program_id(0)
    kt = pl.program_id(1)

    @pl.when(kt == 0)
    def _init():
        out_ref[...] = jnp.zeros_like(out_ref)

    # One-hot built directly in [E_TILE, T_TILE]: lane-major dst row broadcasts along
    # sublanes, and the contraction is the standard orientation (no LHS transpose).
    e_iota = lax.broadcasted_iota(jnp.int32, (e_tile, t_tile), 0) + ke * e_tile
    onehot = (e_iota == dst_ref[...]).astype(jnp.bfloat16)           # [E_TILE, T_TILE]
    out_ref[...] += jnp.dot(onehot, h_ref[...], preferred_element_type=jnp.float32)

    @pl.when(kt == pl.num_programs(1) - 1)
    def _finalize():
        acc = out_ref[...]
        counts = acc[:, dp - 1:dp]                                    # [E_TILE, 1]
        x = acc / jnp.maximum(counts, 1.0)       # scatter_mean (exact divide)

        # --- Dropout (inference): identity ---

        # --- LayerNorm over the real D lanes only (pad + count lanes masked) ---
        lane = lax.broadcasted_iota(jnp.int32, x.shape, 1)
        feat = lane < d_model
        x = jnp.where(feat, x, 0.0)
        inv_d = 1.0 / d_model
        mu = jnp.sum(x, axis=-1, keepdims=True) * inv_d
        xc = jnp.where(feat, x - mu, 0.0)
        var = jnp.sum(xc * xc, axis=-1, keepdims=True) * inv_d
        y = xc * lax.rsqrt(var + LN_EPS)
        out_ref[...] = y * gamma_ref[...] + beta_ref[...]


# ---------------------------------------------------------------------------
# Wrapper
# ---------------------------------------------------------------------------
@jax.jit
def triangle_update(f_edge, triangle, w, b, gamma, beta):
    """f_edge [E, D] f32, triangle [T, 3] int, w [3D, D] (= PyTorch weight^T),
    b [D], gamma/beta [D]. Returns [E, D] f32."""
    E, D = f_edge.shape
    T = triangle.shape[0]

    Dk = _round_up(D, LANE)        # lane-padded input feature width (K of the Linear)
    Dp = _round_up(D + 1, LANE)    # lane-padded output width (+1 fused count lane)

    # --- T tiling: 256-deep tiles (v6e/v7x MXU contraction depth) --------------
    T_TILE = _round_up(T, SUBLANE) if T <= MAX_T_TILE else MAX_T_TILE
    T_pad = _round_up(T, T_TILE)
    nT = T_pad // T_TILE

    # --- E tiling: large tiles, but prefer >=2 tiles so both v7x cores get work -
    E8 = _round_up(E, SUBLANE)
    if E8 <= SUBLANE:
        E_TILE, nE = SUBLANE, 1
    elif E8 <= 2 * MAX_E_TILE:
        E_TILE, nE = _round_up(_cdiv(E, 2), SUBLANE), 2
    else:
        E_TILE, nE = MAX_E_TILE, _cdiv(E, MAX_E_TILE)
    E_pad = nE * E_TILE

    f32, bf16 = jnp.float32, jnp.bfloat16

    # --- lane-padded operands / parameters (linear-size prep, done once) --------
    # f_edge resident in bf16: half the VMEM footprint, no per-tile casts.
    f_edge_p = jnp.zeros((E_pad, Dk), bf16).at[:E, :D].set(f_edge.astype(bf16))
    w3 = w.astype(f32).reshape(3, D, D)
    w_p = jnp.zeros((3, Dk, Dp), f32).at[:, :D, :D].set(w3).astype(bf16)
    b_p = jnp.zeros((1, Dp), f32).at[0, :D].set(b.astype(f32))
    gamma_p = jnp.zeros((1, Dp), f32).at[0, :D].set(gamma.astype(f32))
    beta_p = jnp.zeros((1, Dp), f32).at[0, :D].set(beta.astype(f32))

    tri = triangle.astype(jnp.int32)
    # Pre-clipped gather indices [T_pad, 3] (no in-kernel clamp; padded rows -> 0).
    tri_cols = jnp.zeros((T_pad, 3), jnp.int32).at[:T, :].set(jnp.clip(tri, 0, E - 1))
    # Scatter destinations, lane-major [1, T_pad]; padded triangles -> -1 (match nothing).
    dst = jnp.full((1, T_pad), -1, jnp.int32).at[0, :T].set(tri[:, 2])

    # --- Kernel A: one-hot gather + Linear + GELU (+ fused count lane) ----------
    vmem_a = (2 * E_pad * Dk * 2                              # resident f_edge (bf16)
              + 2 * (3 * Dk * Dp * 2 + Dp * 4)                # weights + bias
              + 2 * (T_TILE * LANE * 4 + T_TILE * Dp * 2)     # tri + h blocks (2 buffers)
              + 3 * (T_TILE * E_pad * 2 + T_TILE * Dk * 4)    # one-hot / gathered rows
              + 4 * T_TILE * Dp * 4                           # f32 temporaries
              + 8 * MIB)                                      # headroom
    vmem_a = min(max(vmem_a, 16 * MIB), 48 * MIB)             # cap below v7x's 64 MiB VMEM

    h_aug = pl.pallas_call(
        _gather_linear_kernel,
        out_shape=jax.ShapeDtypeStruct((T_pad, Dp), bf16),
        grid=(nT,),
        in_specs=[
            pl.BlockSpec((T_TILE, 3), lambda kt: (kt, 0)),        # triangle indices
            pl.BlockSpec((E_pad, Dk), lambda kt: (0, 0)),         # f_edge (resident)
            pl.BlockSpec((3, Dk, Dp), lambda kt: (0, 0, 0)),      # weights
            pl.BlockSpec((1, Dp), lambda kt: (0, 0)),             # bias
        ],
        out_specs=pl.BlockSpec((T_TILE, Dp), lambda kt: (kt, 0)),
        compiler_params=pltpu.CompilerParams(
            dimension_semantics=("parallel",),
            vmem_limit_bytes=vmem_a,
        ),
        cost_estimate=pl.CostEstimate(
            flops=2 * T_pad * E_pad * Dk * 3 + 2 * T_pad * Dk * Dp * 3,
            transcendentals=T_pad * Dp,
            bytes_accessed=(E_pad * Dk * 2 + 3 * Dk * Dp * 2 + Dp * 4
                            + T_pad * 3 * 4 + T_pad * Dp * 2),
        ),
    )(tri_cols, f_edge_p, w_p, b_p)

    # --- Kernel B: tiled scatter-mean + LayerNorm --------------------------------
    vmem_b = (2 * E_TILE * Dp * 4                             # out block (accumulator)
              + 2 * (T_TILE * Dp * 2 + SUBLANE * T_TILE * 4)  # h + dst blocks (2 buffers)
              + E_TILE * T_TILE * 2 + 3 * E_TILE * Dp * 4     # one-hot + epilogue temps
              + 2 * 2 * Dp * 4
              + 8 * MIB)
    vmem_b = min(max(vmem_b, 16 * MIB), 48 * MIB)

    out_p = pl.pallas_call(
        functools.partial(_scatter_ln_kernel, d_model=D),
        out_shape=jax.ShapeDtypeStruct((E_pad, Dp), f32),
        grid=(nE, nT),                                        # reduction (T) axis last
        in_specs=[
            pl.BlockSpec((T_TILE, Dp), lambda ke, kt: (kt, 0)),   # h_aug
            pl.BlockSpec((1, T_TILE), lambda ke, kt: (0, kt)),    # dst (lane-major)
            pl.BlockSpec((1, Dp), lambda ke, kt: (0, 0)),         # gamma
            pl.BlockSpec((1, Dp), lambda ke, kt: (0, 0)),         # beta
        ],
        out_specs=pl.BlockSpec((E_TILE, Dp), lambda ke, kt: (ke, 0)),
        compiler_params=pltpu.CompilerParams(
            dimension_semantics=("parallel", "arbitrary"),
            vmem_limit_bytes=vmem_b,
        ),
        cost_estimate=pl.CostEstimate(
            flops=2 * E_pad * T_pad * Dp + 10 * E_pad * Dp,
            transcendentals=E_pad,
            bytes_accessed=(nE * (T_pad * Dp * 2 + T_pad * 4)
                            + E_pad * Dp * 4 + 2 * Dp * 4),
        ),
    )(h_aug, dst, gamma_p, beta_p)

    return out_p[:E, :D]


# ---------------------------------------------------------------------------
# Pure-JAX reference (f32), PyTorch TriangleUpdate semantics
# ---------------------------------------------------------------------------
def _reference(f_edge, triangle, w, b, gamma, beta):
    E, D = f_edge.shape
    T = triangle.shape[0]
    f_cat = f_edge[triangle].reshape(T, 3 * D)
    h = jax.nn.gelu(f_cat @ w + b, approximate=False)
    idx2 = triangle[:, 2]
    scat_sum = jnp.zeros((E, D), jnp.float32).at[idx2].add(h)
    cnt = jnp.zeros((E,), jnp.float32).at[idx2].add(1.0)
    sm = scat_sum / jnp.maximum(cnt, 1.0)[:, None]
    mu = sm.mean(-1, keepdims=True)
    var = ((sm - mu) ** 2).mean(-1, keepdims=True)
    return (sm - mu) / jnp.sqrt(var + LN_EPS) * gamma + beta


if __name__ == "__main__":
    def run_case(case_key, E, D, T, tol=5e-2):
        k1, k2, k3, k4 = jax.random.split(case_key, 4)
        f_edge = jax.random.normal(k1, (E, D), jnp.float32)
        triangle = jax.random.randint(k2, (T, 3), 0, E, jnp.int32)
        # nn.Linear(3D, D): weight [D, 3D]; pass its transpose [3D, D].
        w = jax.random.normal(k3, (3 * D, D), jnp.float32) * (1.0 / jnp.sqrt(3.0 * D))
        b = jax.random.normal(k4, (D,), jnp.float32) * 0.01
        gamma = jnp.ones((D,), jnp.float32)    # nn.LayerNorm default init
        beta = jnp.zeros((D,), jnp.float32)

        out = jax.block_until_ready(
            triangle_update(f_edge, triangle, w, b, gamma, beta))
        ref = _reference(f_edge, triangle, w, b, gamma, beta)
        assert out.shape == (E, D)
        # bf16 MXU operands (f32 accumulate) -> slightly looser tolerance vs f32 ref.
        assert jnp.allclose(out, ref, atol=tol, rtol=tol), \
            f"mismatch vs reference (E={E}, D={D}, T={T})"

    key = jax.random.PRNGKey(0)
    ka, kb, kc = jax.random.split(key, 3)
    run_case(ka, E=16, D=32, T=8)        # tiny single-T-tile path (nE=2, nT=1)
    run_case(kb, E=300, D=32, T=200)     # mid path (nE=2, nT=1, unaligned E)
    run_case(kc, E=500, D=64, T=600)     # multi-T-tile accumulation path (nE=2, nT=3)

    print("KERNEL_OK")
</pallas_src>

<mosaic_0001>
module attributes {stable_mosaic.version = 11 : i64} {
  func.func @_gather_linear_kernel(%arg0: i32, %arg1: memref<8x3xi32, #tpu.memory_space<vmem>>, %arg2: memref<16x128xbf16, #tpu.memory_space<vmem>>, %arg3: memref<3x128x128xbf16, #tpu.memory_space<vmem>>, %arg4: memref<1x128xf32, #tpu.memory_space<vmem>>, %arg5: memref<8x128xbf16, #tpu.memory_space<vmem>>) attributes {dimension_semantics = [#tpu.dimension_semantics<parallel>], iteration_bounds = array<i64: 1>, scalar_prefetch = 0 : i64, scratch_operands = 0 : i64, tpu.core_type = #tpu.core_type<tc>, window_params = [{transform_indices = @transform_0, window_bounds = array<i64: 8, 3>}, {pipeline_mode = #tpu.pipeline_mode<synchronous>, transform_indices = @transform_1, window_bounds = array<i64: 16, 128>}, {pipeline_mode = #tpu.pipeline_mode<synchronous>, transform_indices = @transform_2, window_bounds = array<i64: 3, 128, 128>}, {pipeline_mode = #tpu.pipeline_mode<synchronous>, transform_indices = @transform_3, window_bounds = array<i64: 1, 128>}, {transform_indices = @transform_4, window_bounds = array<i64: 8, 128>}]} {
    %c0 = arith.constant 0 : index
    %c0_0 = arith.constant 0 : index
    %0 = vector.load %arg1[%c0, %c0_0] : memref<8x3xi32, #tpu.memory_space<vmem>>, vector<8x3xi32>
    %c0_1 = arith.constant 0 : index
    %c0_2 = arith.constant 0 : index
    %1 = vector.load %arg2[%c0_1, %c0_2] : memref<16x128xbf16, #tpu.memory_space<vmem>>, vector<16x128xbf16>
    %2 = tpu.iota {dimensions = array<i32: 1>} : vector<8x16xi32>
    %3 = vector.extract_strided_slice %0 {offsets = [0, 0], sizes = [8, 1], strides = [1, 1]} : vector<8x3xi32> to vector<8x1xi32>
    %4 = vector.broadcast %3 : vector<8x1xi32> to vector<8x16xi32>
    %5 = arith.cmpi eq, %4, %2 : vector<8x16xi32>
    %6 = arith.extui %5 : vector<8x16xi1> to vector<8x16xi32>
    %7 = arith.sitofp %6 : vector<8x16xi32> to vector<8x16xf32>
    %8 = arith.truncf %7 : vector<8x16xf32> to vector<8x16xbf16>
    %cst = arith.constant dense<0.000000e+00> : vector<8x128xf32>
    %9 = tpu.matmul %8, %1, %cst {dimension_numbers = #tpu.dot_dimension_numbers<[1], [0], [0], [1], [0, 0, 1, 1], [], []>} : vector<8x16xbf16>, vector<16x128xbf16>, vector<8x128xf32> -> vector<8x128xf32>
    %10 = arith.truncf %9 : vector<8x128xf32> to vector<8x128xbf16>
    %c0_3 = arith.constant 0 : index
    %c0_4 = arith.constant 0 : index
    %c0_5 = arith.constant 0 : index
    %11 = vector.load %arg3[%c0_3, %c0_4, %c0_5] : memref<3x128x128xbf16, #tpu.memory_space<vmem>>, vector<1x128x128xbf16>
    %12 = vector.shape_cast %11 : vector<1x128x128xbf16> to vector<128x128xbf16>
    %cst_6 = arith.constant dense<0.000000e+00> : vector<8x128xf32>
    %13 = tpu.matmul %10, %12, %cst_6 {dimension_numbers = #tpu.dot_dimension_numbers<[1], [0], [0], [1], [0, 0, 1, 1], [], []>} : vector<8x128xbf16>, vector<128x128xbf16>, vector<8x128xf32> -> vector<8x128xf32>
    %14 = vector.extract_strided_slice %0 {offsets = [0, 1], sizes = [8, 1], strides = [1, 1]} : vector<8x3xi32> to vector<8x1xi32>
    %15 = vector.broadcast %14 : vector<8x1xi32> to vector<8x16xi32>
    %16 = arith.cmpi eq, %15, %2 : vector<8x16xi32>
    %17 = arith.extui %16 : vector<8x16xi1> to vector<8x16xi32>
    %18 = arith.sitofp %17 : vector<8x16xi32> to vector<8x16xf32>
    %19 = arith.truncf %18 : vector<8x16xf32> to vector<8x16xbf16>
    %cst_7 = arith.constant dense<0.000000e+00> : vector<8x128xf32>
    %20 = tpu.matmul %19, %1, %cst_7 {dimension_numbers = #tpu.dot_dimension_numbers<[1], [0], [0], [1], [0, 0, 1, 1], [], []>} : vector<8x16xbf16>, vector<16x128xbf16>, vector<8x128xf32> -> vector<8x128xf32>
    %21 = arith.truncf %20 : vector<8x128xf32> to vector<8x128xbf16>
    %c1 = arith.constant 1 : index
    %c0_8 = arith.constant 0 : index
    %c0_9 = arith.constant 0 : index
    %22 = vector.load %arg3[%c1, %c0_8, %c0_9] : memref<3x128x128xbf16, #tpu.memory_space<vmem>>, vector<1x128x128xbf16>
    %23 = vector.shape_cast %22 : vector<1x128x128xbf16> to vector<128x128xbf16>
    %cst_10 = arith.constant dense<0.000000e+00> : vector<8x128xf32>
    %24 = tpu.matmul %21, %23, %cst_10 {dimension_numbers = #tpu.dot_dimension_numbers<[1], [0], [0], [1], [0, 0, 1, 1], [], []>} : vector<8x128xbf16>, vector<128x128xbf16>, vector<8x128xf32> -> vector<8x128xf32>
    %25 = arith.addf %13, %24 : vector<8x128xf32>
    %26 = vector.extract_strided_slice %0 {offsets = [0, 2], sizes = [8, 1], strides = [1, 1]} : vector<8x3xi32> to vector<8x1xi32>
    %27 = vector.broadcast %26 : vector<8x1xi32> to vector<8x16xi32>
    %28 = arith.cmpi eq, %27, %2 : vector<8x16xi32>
    %29 = arith.extui %28 : vector<8x16xi1> to vector<8x16xi32>
    %30 = arith.sitofp %29 : vector<8x16xi32> to vector<8x16xf32>
    %31 = arith.truncf %30 : vector<8x16xf32> to vector<8x16xbf16>
    %cst_11 = arith.constant dense<0.000000e+00> : vector<8x128xf32>
    %32 = tpu.matmul %31, %1, %cst_11 {dimension_numbers = #tpu.dot_dimension_numbers<[1], [0], [0], [1], [0, 0, 1, 1], [], []>} : vector<8x16xbf16>, vector<16x128xbf16>, vector<8x128xf32> -> vector<8x128xf32>
    %33 = arith.truncf %32 : vector<8x128xf32> to vector<8x128xbf16>
    %c2 = arith.constant 2 : index
    %c0_12 = arith.constant 0 : index
    %c0_13 = arith.constant 0 : index
    %34 = vector.load %arg3[%c2, %c0_12, %c0_13] : memref<3x128x128xbf16, #tpu.memory_space<vmem>>, vector<1x128x128xbf16>
    %35 = vector.shape_cast %34 : vector<1x128x128xbf16> to vector<128x128xbf16>
    %cst_14 = arith.constant dense<0.000000e+00> : vector<8x128xf32>
    %36 = tpu.matmul %33, %35, %cst_14 {dimension_numbers = #tpu.dot_dimension_numbers<[1], [0], [0], [1], [0, 0, 1, 1], [], []>} : vector<8x128xbf16>, vector<128x128xbf16>, vector<8x128xf32> -> vector<8x128xf32>
    %37 = arith.addf %25, %36 : vector<8x128xf32>
    %c0_15 = arith.constant 0 : index
    %c0_16 = arith.constant 0 : index
    %38 = vector.load %arg4[%c0_15, %c0_16] : memref<1x128xf32, #tpu.memory_space<vmem>>, vector<1x128xf32>
    %39 = vector.broadcast %38 : vector<1x128xf32> to vector<8x128xf32>
    %40 = arith.addf %37, %39 : vector<8x128xf32>
    %cst_17 = arith.constant 5.000000e-01 : f32
    %41 = vector.broadcast %cst_17 : f32 to vector<8x128xf32>
    %42 = arith.mulf %41, %40 : vector<8x128xf32>
    %cst_18 = arith.constant 0.707106769 : f32
    %43 = vector.broadcast %cst_18 : f32 to vector<8x128xf32>
    %44 = arith.mulf %40, %43 : vector<8x128xf32>
    %45 = math.erf %44 : vector<8x128xf32>
    %cst_19 = arith.constant 1.000000e+00 : f32
    %46 = vector.broadcast %cst_19 : f32 to vector<8x128xf32>
    %47 = arith.addf %46, %45 : vector<8x128xf32>
    %48 = arith.mulf %42, %47 : vector<8x128xf32>
    %49 = tpu.iota {dimensions = array<i32: 1>} : vector<8x128xi32>
    %c127_i32 = arith.constant 127 : i32
    %50 = vector.broadcast %c127_i32 : i32 to vector<8x128xi32>
    %51 = arith.cmpi eq, %49, %50 : vector<8x128xi32>
    %cst_20 = arith.constant 1.000000e+00 : f32
    %52 = vector.broadcast %cst_20 : f32 to vector<8x128xf32>
    %53 = arith.select %51, %52, %48 : vector<8x128xi1>, vector<8x128xf32>
    %54 = arith.truncf %53 : vector<8x128xf32> to vector<8x128xbf16>
    %c0_21 = arith.constant 0 : index
    %c0_22 = arith.constant 0 : index
    %55 = vector.load %arg5[%c0_21, %c0_22] : memref<8x128xbf16, #tpu.memory_space<vmem>>, vector<8x128xbf16>
    tpu.vector_store %arg5[%c0_21, %c0_22], %54 {strides = array<i32>} : memref<8x128xbf16, #tpu.memory_space<vmem>>, vector<8x128xbf16>,
    return
  }
  func.func @transform_0(%arg0: i32) -> (i32, i32) {
    %c0_i32 = arith.constant 0 : i32
    %c0_i32_0 = arith.constant 0 : i32
    return %arg0, %c0_i32 : i32, i32
  }
  func.func @transform_1(%arg0: i32) -> (i32, i32) {
    %c0_i32 = arith.constant 0 : i32
    %c0_i32_0 = arith.constant 0 : i32
    %c0_i32_1 = arith.constant 0 : i32
    return %c0_i32, %c0_i32_0 : i32, i32
  }
  func.func @transform_2(%arg0: i32) -> (i32, i32, i32) {
    %c0_i32 = arith.constant 0 : i32
    %c0_i32_0 = arith.constant 0 : i32
    %c0_i32_1 = arith.constant 0 : i32
    %c0_i32_2 = arith.constant 0 : i32
    return %c0_i32, %c0_i32_0, %c0_i32_1 : i32, i32, i32
  }
  func.func @transform_3(%arg0: i32) -> (i32, i32) {
    %c0_i32 = arith.constant 0 : i32
    %c0_i32_0 = arith.constant 0 : i32
    %c0_i32_1 = arith.constant 0 : i32
    return %c0_i32, %c0_i32_0 : i32, i32
  }
  func.func @transform_4(%arg0: i32) -> (i32, i32) {
    %c0_i32 = arith.constant 0 : i32
    %c0_i32_0 = arith.constant 0 : i32
    return %arg0, %c0_i32 : i32, i32
  }
}

module attributes {stable_mosaic.version = 11 : i64} {
  func.func @_scatter_ln_kernel(%arg0: i32, %arg1: i32, %arg2: memref<8x128xbf16, #tpu.memory_space<vmem>>, %arg3: memref<1x8xi32, #tpu.memory_space<vmem>>, %arg4: memref<1x128xf32, #tpu.memory_space<vmem>>, %arg5: memref<1x128xf32, #tpu.memory_space<vmem>>, %arg6: memref<8x128xf32, #tpu.memory_space<vmem>>) attributes {dimension_semantics = [#tpu.dimension_semantics<parallel>, #tpu.dimension_semantics<arbitrary>], iteration_bounds = array<i64: 2, 1>, scalar_prefetch = 0 : i64, scratch_operands = 0 : i64, tpu.core_type = #tpu.core_type<tc>, window_params = [{transform_indices = @transform_0, window_bounds = array<i64: 8, 128>}, {transform_indices = @transform_1, window_bounds = array<i64: 1, 8>}, {pipeline_mode = #tpu.pipeline_mode<synchronous>, transform_indices = @transform_2, window_bounds = array<i64: 1, 128>}, {pipeline_mode = #tpu.pipeline_mode<synchronous>, transform_indices = @transform_3, window_bounds = array<i64: 1, 128>}, {transform_indices = @transform_4, window_bounds = array<i64: 8, 128>}]} {
    %c0_i32 = arith.constant 0 : i32
    %0 = arith.cmpi eq, %arg1, %c0_i32 : i32
    %1 = arith.extui %0 : i1 to i32
    %c0_i32_0 = arith.constant 0 : i32
    %2 = arith.cmpi ne, %1, %c0_i32_0 : i32
    scf.if %2 {
      %cst_10 = arith.constant 0.000000e+00 : f32
      %21 = vector.broadcast %cst_10 : f32 to vector<8x128xf32>
      %c0_11 = arith.constant 0 : index
      %c0_12 = arith.constant 0 : index
      %22 = vector.load %arg6[%c0_11, %c0_12] : memref<8x128xf32, #tpu.memory_space<vmem>>, vector<8x128xf32>
      tpu.vector_store %arg6[%c0_11, %c0_12], %21 {strides = array<i32>} : memref<8x128xf32, #tpu.memory_space<vmem>>, vector<8x128xf32>,
    } else {
    }
    %3 = tpu.iota {dimensions = array<i32: 0>} : vector<8x8xi32>
    %c8_i32 = arith.constant 8 : i32
    %4 = arith.muli %arg0, %c8_i32 : i32
    %5 = vector.broadcast %4 : i32 to vector<8x8xi32>
    %6 = arith.addi %3, %5 : vector<8x8xi32>
    %c0 = arith.constant 0 : index
    %c0_1 = arith.constant 0 : index
    %7 = vector.load %arg3[%c0, %c0_1] : memref<1x8xi32, #tpu.memory_space<vmem>>, vector<1x8xi32>
    %8 = vector.broadcast %7 : vector<1x8xi32> to vector<8x8xi32>
    %9 = arith.cmpi eq, %6, %8 : vector<8x8xi32>
    %10 = arith.extui %9 : vector<8x8xi1> to vector<8x8xi32>
    %11 = arith.sitofp %10 : vector<8x8xi32> to vector<8x8xf32>
    %12 = arith.truncf %11 : vector<8x8xf32> to vector<8x8xbf16>
    %c0_2 = arith.constant 0 : index
    %c0_3 = arith.constant 0 : index
    %13 = vector.load %arg6[%c0_2, %c0_3] : memref<8x128xf32, #tpu.memory_space<vmem>>, vector<8x128xf32>
    %c0_4 = arith.constant 0 : index
    %c0_5 = arith.constant 0 : index
    %14 = vector.load %arg2[%c0_4, %c0_5] : memref<8x128xbf16, #tpu.memory_space<vmem>>, vector<8x128xbf16>
    %cst = arith.constant dense<0.000000e+00> : vector<8x128xf32>
    %15 = tpu.matmul %12, %14, %cst {dimension_numbers = #tpu.dot_dimension_numbers<[1], [0], [0], [1], [0, 0, 1, 1], [], []>} : vector<8x8xbf16>, vector<8x128xbf16>, vector<8x128xf32> -> vector<8x128xf32>
    %16 = arith.addf %13, %15 : vector<8x128xf32>
    %c0_6 = arith.constant 0 : index
    %c0_7 = arith.constant 0 : index
    %17 = vector.load %arg6[%c0_6, %c0_7] : memref<8x128xf32, #tpu.memory_space<vmem>>, vector<8x128xf32>
    tpu.vector_store %arg6[%c0_6, %c0_7], %16 {strides = array<i32>} : memref<8x128xf32, #tpu.memory_space<vmem>>, vector<8x128xf32>,
    %c0_i32_8 = arith.constant 0 : i32
    %18 = arith.cmpi eq, %arg1, %c0_i32_8 : i32
    %19 = arith.extui %18 : i1 to i32
    %c0_i32_9 = arith.constant 0 : i32
    %20 = arith.cmpi ne, %19, %c0_i32_9 : i32
    scf.if %20 {
      %c0_10 = arith.constant 0 : index
      %c0_11 = arith.constant 0 : index
      %21 = vector.load %arg6[%c0_10, %c0_11] : memref<8x128xf32, #tpu.memory_space<vmem>>, vector<8x128xf32>
      %22 = vector.extract_strided_slice %21 {offsets = [0, 127], sizes = [8, 1], strides = [1, 1]} : vector<8x128xf32> to vector<8x1xf32>
      %cst_12 = arith.constant 1.000000e+00 : f32
      %23 = vector.broadcast %cst_12 : f32 to vector<8x1xf32>
      %24 = arith.maximumf %22, %23 : vector<8x1xf32>
      %25 = vector.broadcast %24 : vector<8x1xf32> to vector<8x128xf32>
      %26 = arith.divf %21, %25 : vector<8x128xf32>
      %27 = tpu.iota {dimensions = array<i32: 1>} : vector<8x128xi32>
      %c32_i32 = arith.constant 32 : i32
      %28 = vector.broadcast %c32_i32 : i32 to vector<8x128xi32>
      %29 = arith.cmpi slt, %27, %28 : vector<8x128xi32>
      %cst_13 = arith.constant 0.000000e+00 : f32
      %30 = vector.broadcast %cst_13 : f32 to vector<8x128xf32>
      %31 = arith.select %29, %26, %30 : vector<8x128xi1>, vector<8x128xf32>
      %cst_14 = arith.constant dense<0.000000e+00> : vector<8xf32>
      %32 = vector.multi_reduction <add>, %31, %cst_14 [1] : vector<8x128xf32> to vector<8xf32>
      %33 = vector.shape_cast %32 : vector<8xf32> to vector<8x1xf32>
      %cst_15 = arith.constant 3.125000e-02 : f32
      %34 = vector.broadcast %cst_15 : f32 to vector<8x1xf32>
      %35 = arith.mulf %33, %34 : vector<8x1xf32>
      %36 = vector.broadcast %35 : vector<8x1xf32> to vector<8x128xf32>
      %37 = arith.subf %31, %36 : vector<8x128xf32>
      %cst_16 = arith.constant 0.000000e+00 : f32
      %38 = vector.broadcast %cst_16 : f32 to vector<8x128xf32>
      %39 = arith.select %29, %37, %38 : vector<8x128xi1>, vector<8x128xf32>
      %40 = arith.mulf %39, %39 : vector<8x128xf32>
      %cst_17 = arith.constant dense<0.000000e+00> : vector<8xf32>
      %41 = vector.multi_reduction <add>, %40, %cst_17 [1] : vector<8x128xf32> to vector<8xf32>
      %42 = vector.shape_cast %41 : vector<8xf32> to vector<8x1xf32>
      %cst_18 = arith.constant 3.125000e-02 : f32
      %43 = vector.broadcast %cst_18 : f32 to vector<8x1xf32>
      %44 = arith.mulf %42, %43 : vector<8x1xf32>
      %cst_19 = arith.constant 9.99999974E-6 : f32
      %45 = vector.broadcast %cst_19 : f32 to vector<8x1xf32>
      %46 = arith.addf %44, %45 : vector<8x1xf32>
      %47 = math.rsqrt %46 : vector<8x1xf32>
      %48 = vector.broadcast %47 : vector<8x1xf32> to vector<8x128xf32>
      %49 = arith.mulf %39, %48 : vector<8x128xf32>
      %c0_20 = arith.constant 0 : index
      %c0_21 = arith.constant 0 : index
      %50 = vector.load %arg4[%c0_20, %c0_21] : memref<1x128xf32, #tpu.memory_space<vmem>>, vector<1x128xf32>
      %51 = vector.broadcast %50 : vector<1x128xf32> to vector<8x128xf32>
      %52 = arith.mulf %49, %51 : vector<8x128xf32>
      %c0_22 = arith.constant 0 : index
      %c0_23 = arith.constant 0 : index
      %53 = vector.load %arg5[%c0_22, %c0_23] : memref<1x128xf32, #tpu.memory_space<vmem>>, vector<1x128xf32>
      %54 = vector.broadcast %53 : vector<1x128xf32> to vector<8x128xf32>
      %55 = arith.addf %52, %54 : vector<8x128xf32>
      %c0_24 = arith.constant 0 : index
      %c0_25 = arith.constant 0 : index
      %56 = vector.load %arg6[%c0_24, %c0_25] : memref<8x128xf32, #tpu.memory_space<vmem>>, vector<8x128xf32>
      tpu.vector_store %arg6[%c0_24, %c0_25], %55 {strides = array<i32>} : memref<8x128xf32, #tpu.memory_space<vmem>>, vector<8x128xf32>,
    } else {
    }
    return
  }
  func.func @transform_0(%arg0: i32, %arg1: i32) -> (i32, i32) {
    %c0_i32 = arith.constant 0 : i32
    %c0_i32_0 = arith.constant 0 : i32
    return %arg1, %c0_i32 : i32, i32
  }
  func.func @transform_1(%arg0: i32, %arg1: i32) -> (i32, i32) {
    %c0_i32 = arith.constant 0 : i32
    %c0_i32_0 = arith.constant 0 : i32
    return %c0_i32, %arg1 : i32, i32
  }
  func.func @transform_2(%arg0: i32, %arg1: i32) -> (i32, i32) {
    %c0_i32 = arith.constant 0 : i32
    %c0_i32_0 = arith.constant 0 : i32
    %c0_i32_1 = arith.constant 0 : i32
    return %c0_i32, %c0_i32_0 : i32, i32
  }
  func.func @transform_3(%arg0: i32, %arg1: i32) -> (i32, i32) {
    %c0_i32 = arith.constant 0 : i32
    %c0_i32_0 = arith.constant 0 : i32
    %c0_i32_1 = arith.constant 0 : i32
    return %c0_i32, %c0_i32_0 : i32, i32
  }
  func.func @transform_4(%arg0: i32, %arg1: i32) -> (i32, i32) {
    %c0_i32 = arith.constant 0 : i32
    %c0_i32_0 = arith.constant 0 : i32
    return %arg0, %c0_i32 : i32, i32
  }
}

</mosaic_0001>

<llo_original>
// kernel: triangle_update.3
$region0: #{triangle_update.3}
  #allocation0 [shape = 'u32[]', space=smem, size = 0x4, offset = 0x4, fixed_abs, tag = 'smem constant byte address 0x4 - core index']
  #allocation1 [shape = 'u32[144,128]{1,0:T(1,128)}', space=vmem, size = 0x12000, scoped, tag = 'internal scratch']
  %s0 = inlined_call_operand.vmem [shape: bf16[8,128], index: 0, kind: input, shape index: {}]
  %s1 = inlined_call_operand.vmem [shape: s32[1,8], index: 1, kind: input, shape index: {}]
  %s2 = inlined_call_operand.vmem [shape: f32[1,128], index: 2, kind: input, shape index: {}]
  %s3 = inlined_call_operand.vmem [shape: f32[1,128], index: 3, kind: input, shape index: {}]
  %s4 = inlined_call_operand.hbm [shape: f32[16,128], index: 4, kind: output, shape index: {}]
  %s5 = sld [smem:[#allocation0]]
  $region57: #{triangle_update.3} parent=0
    _
  %s7 = ssub.s32 1, %s5
  %s8 = scalar_select 0, %s7, %s5
  $region1: #{triangle_update.3} parent=0
    #allocation2 [shape = 'u8[8192]{0}', space=vmem, size = 0x2000, scoped, tag = 'output window, operand 0']
    #allocation3 [shape = 's32[2]{0}', space=sflag, size = 0x8, scoped, tag = 'scoped memory for triangle_update.3']
    %9 = vsyncpa [#allocation3], 0
    %s10 = scalar_lea.sflag [#allocation3], 1
    %11 = vsyncpa %s10, 0
    loop: start=0, step=1, limit=4
    $region2: #{triangle_update.3} parent=1 // loop_pre_header
      _
    $region3: #{triangle_update.3} parent=1 // loop_header
      %s13 = sphi 0, %s17
      %p14 = scmp.ge.s32.totalorder %s13, 4
      %s20 = sphi 0, %s32
      %s21 = sphi 0, %s28
      %s22 = sphi 0, %s20
      %s23 = sphi 0, %s21
      %s24 = sphi 0, %s22
      %s25 = sphi 0, %s23
      %s35 = sphi 0, %s37
      %s38 = sphi 0, %s35
      %s39 = sphi 0, %s38
      %s55 = sphi 0, %s39
      %s61 = sphi 0, %s63
      %s64 = sphi 0, %s61
      %s65 = sphi 0, %s64
      %s81 = sphi 0, %s65
      %s85 = sphi 0, %s85
      %s87 = sphi 0, %s85
      %s88 = sphi 0, %s87
      %s102 = sphi 0, %s88
      %s106 = sphi 0, %s106
      %s108 = sphi 0, %s106
      %s109 = sphi 0, %s108
      %s123 = sphi 0, %s109
      %s129 = sphi 0, %s131
      %s132 = sphi 0, %s129
      %s133 = sphi 0, %s132
      %s149 = sphi 0, %s133
    $region4: #{triangle_update.3} parent=1 // loop_header_branch
      %16 = sbr.rel (%p14) target = $region8
    $region5: #{triangle_update.3} parent=1 // loop_body
      %s18 = ssub.s32 %s13, 1
      %s19 = ssub.s32 %s13, 2
      %s26 = sadd.s32 1, %s21
      %p27 = scmp.ge.s32.totalorder %s26, 1
      %s28 = scalar_select %p27, 0, %s26
      %s29 = sadd.s32 1, %s20
      %s30 = scalar_select %p27, %s29, %s20
      %p31 = scmp.ge.s32.totalorder %s30, 2
      %s32 = scalar_select %p31, 0, %s30
      %s33 = ssub.s32 %s21, %s28
      %p34 = scmp.eq.s32.totalorder %s33, 0
      %s36 = sadd.s32 %s35, 1
      %s37 = scalar_select %p34, %s35, %s36
      %p40 = pneg %p34
      %p41 = scmp.eq.s32.totalorder %s13, 1
      %p42 = por %p40, %p41
      %p43 = scmp.ne.s32.totalorder %s35, %s38
      %p44 = scmp.eq.s32.totalorder %s13, 0
      %p45 = por %p43, %p44
      %p46 = scmp.ne.s32.totalorder %s35, %s38
      %p47 = scmp.eq.s32.totalorder %s18, 1
      %p48 = por %p46, %p47
      %p49 = scmp.ne.s32.totalorder %s38, %s39
      %p50 = scmp.eq.s32.totalorder %s18, 0
      %p51 = por %p49, %p50
      %p52 = scmp.ne.s32.totalorder %s38, %s39
      %p53 = scmp.eq.s32.totalorder %s19, 1
      %p54 = por %p52, %p53
      %p56 = scmp.ne.s32.totalorder %s39, %s55
      %p57 = scmp.eq.s32.totalorder %s19, 0
      %p58 = por %p56, %p57
      %s59 = ssub.s32 %s21, %s28
      %p60 = scmp.eq.s32.totalorder %s59, 0
      %s62 = sadd.s32 %s61, 1
      %s63 = scalar_select %p60, %s61, %s62
      %p66 = pneg %p60
      %p67 = scmp.eq.s32.totalorder %s13, 1
      %p68 = por %p66, %p67
      %p69 = scmp.ne.s32.totalorder %s61, %s64
      %p70 = scmp.eq.s32.totalorder %s13, 0
      %p71 = por %p69, %p70
      %p72 = scmp.ne.s32.totalorder %s61, %s64
      %p73 = scmp.eq.s32.totalorder %s18, 1
      %p74 = por %p72, %p73
      %p75 = scmp.ne.s32.totalorder %s64, %s65
      %p76 = scmp.eq.s32.totalorder %s18, 0
      %p77 = por %p75, %p76
      %p78 = scmp.ne.s32.totalorder %s64, %s65
      %p79 = scmp.eq.s32.totalorder %s19, 1
      %p80 = por %p78, %p79
      %p82 = scmp.ne.s32.totalorder %s65, %s81
      %p83 = scmp.eq.s32.totalorder %s19, 0
      %p84 = por %p82, %p83
      %s86 = sadd.s32 %s85, 1
      %p89 = scmp.eq.s32.totalorder %s13, 1
      %p90 = scmp.ne.s32.totalorder %s85, %s87
      %p91 = scmp.eq.s32.totalorder %s13, 0
      %p92 = por %p90, %p91
      %p93 = scmp.ne.s32.totalorder %s85, %s87
      %p94 = scmp.eq.s32.totalorder %s18, 1
      %p95 = por %p93, %p94
      %p96 = scmp.ne.s32.totalorder %s87, %s88
      %p97 = scmp.eq.s32.totalorder %s18, 0
      %p98 = por %p96, %p97
      %p99 = scmp.ne.s32.totalorder %s87, %s88
      %p100 = scmp.eq.s32.totalorder %s19, 1
      %p101 = por %p99, %p100
      %p103 = scmp.ne.s32.totalorder %s88, %s102
      %p104 = scmp.eq.s32.totalorder %s19, 0
      %p105 = por %p103, %p104
      %s107 = sadd.s32 %s106, 1
      %p110 = scmp.eq.s32.totalorder %s13, 1
      %p111 = scmp.ne.s32.totalorder %s106, %s108
      %p112 = scmp.eq.s32.totalorder %s13, 0
      %p113 = por %p111, %p112
      %p114 = scmp.ne.s32.totalorder %s106, %s108
      %p115 = scmp.eq.s32.totalorder %s18, 1
      %p116 = por %p114, %p115
      %p117 = scmp.ne.s32.totalorder %s108, %s109
      %p118 = scmp.eq.s32.totalorder %s18, 0
      %p119 = por %p117, %p118
      %p120 = scmp.ne.s32.totalorder %s108, %s109
      %p121 = scmp.eq.s32.totalorder %s19, 1
      %p122 = por %p120, %p121
      %p124 = scmp.ne.s32.totalorder %s109, %s123
      %p125 = scmp.eq.s32.totalorder %s19, 0
      %p126 = por %p124, %p125
      %s127 = ssub.s32 %s20, %s32
      %p128 = scmp.eq.s32.totalorder %s127, 0
      %s130 = sadd.s32 %s129, 1
      %s131 = scalar_select %p128, %s129, %s130
      %p134 = pneg %p128
      %p135 = scmp.eq.s32.totalorder %s13, 1
      %p136 = por %p134, %p135
      %p137 = scmp.ne.s32.totalorder %s129, %s132
      %p138 = scmp.eq.s32.totalorder %s13, 0
      %p139 = por %p137, %p138
      %p140 = scmp.ne.s32.totalorder %s129, %s132
      %p141 = scmp.eq.s32.totalorder %s18, 1
      %p142 = por %p140, %p141
      %p143 = scmp.ne.s32.totalorder %s132, %s133
      %p144 = scmp.eq.s32.totalorder %s18, 0
      %p145 = por %p143, %p144
      %p146 = scmp.ne.s32.totalorder %s132, %s133
      %p147 = scmp.eq.s32.totalorder %s19, 1
      %p148 = por %p146, %p147
      %p150 = scmp.ne.s32.totalorder %s133, %s149
      %p151 = scmp.eq.s32.totalorder %s19, 0
      %p152 = por %p150, %p151
      %p153 = scmp.le.s32.totalorder 1, %s13
      %p154 = scmp.lt.s32.totalorder %s13, 3
      %p155 = pnand %p153, %p154
      %p156 = pneg %p155
      // Predicated region
      $region9: #{triangle_update.3} parent=5 // pred_check
        _
      $region10: #{triangle_update.3} parent=5 // pred_check_branch
        %158 = sbr.rel (%p155) target = $region12
      $region11: #{triangle_update.3} parent=5 // pred_region
        %s159 = ssub.s32 %s13, 1
        // Predicated region
        $region13: #{triangle_update.3} parent=11 // pred_check
          %p160 = pneg %p51
        $region14: #{triangle_update.3} parent=11 // pred_check_branch
          %162 = sbr.rel (%p160) target = $region16
        $region15: #{triangle_update.3} parent=11 // pred_region
          %p163 = scmp.lt.s32.totalorder %s23, 0
          %s164 = scalar_select %p163, %s23, 0
          %s165 = smul.addr %s164, 4
          %s166 = scalar_lea.vmem %s0, %s165
        $region16: #{triangle_update.3} parent=11 // pred_fallthru
          _
        // Predicated region
        $region17: #{triangle_update.3} parent=11 // pred_check
          %p167 = pneg %p77
        $region18: #{triangle_update.3} parent=11 // pred_check_branch
          %169 = sbr.rel (%p167) target = $region20
        $region19: #{triangle_update.3} parent=11 // pred_region
          %p170 = scmp.lt.s32.totalorder %s23, 0
          %s171 = scalar_select %p170, %s23, 0
          %s172 = scalar_lea.vmem %s1, %s171
        $region20: #{triangle_update.3} parent=11 // pred_fallthru
          _
        // Predicated region
        $region21: #{triangle_update.3} parent=11 // pred_check
          %p173 = pneg %p98
        $region22: #{triangle_update.3} parent=11 // pred_check_branch
          %175 = sbr.rel (%p173) target = $region24
        $region23: #{triangle_update.3} parent=11 // pred_region
          _
        $region24: #{triangle_update.3} parent=11 // pred_fallthru
          _
        // Predicated region
        $region25: #{triangle_update.3} parent=11 // pred_check
          %p176 = pneg %p119
        $region26: #{triangle_update.3} parent=11 // pred_check_branch
          %178 = sbr.rel (%p176) target = $region28
        $region27: #{triangle_update.3} parent=11 // pred_region
          _
        $region28: #{triangle_update.3} parent=11 // pred_fallthru
          _
      $region12: #{triangle_update.3} parent=5 // pred_fallthru
        _
      %p179 = scmp.lt.s32.totalorder %s13, 2
      // Predicated region
      $region29: #{triangle_update.3} parent=5 // pred_check
        %p180 = pneg %p179
      $region30: #{triangle_update.3} parent=5 // pred_check_branch
        %182 = sbr.rel (%p180) target = $region32
      $region31: #{triangle_update.3} parent=5 // pred_region
        _
      $region32: #{triangle_update.3} parent=5 // pred_fallthru
        _
      %p183 = scmp.le.s32.totalorder 1, %s13
      %p184 = scmp.lt.s32.totalorder %s13, 3
      %p185 = pnand %p183, %p184
      %p186 = pneg %p185
      // Predicated region
      $region33: #{triangle_update.3} parent=5 // pred_check
        _
      $region34: #{triangle_update.3} parent=5 // pred_check_branch
        %188 = sbr.rel (%p185) target = $region36
      $region35: #{triangle_update.3} parent=5 // pred_region
        %s189 = ssub.s32 %s13, 1
        %p190 = scmp.lt.s32.totalorder %s23, 0
        %s191 = scalar_select %p190, %s23, 0
        %s192 = smul.addr %s191, 4
        %s193 = scalar_lea.vmem %s0, %s192
        %p194 = pneg %p51
        %p195 = pneg %p48
        %p196 = scmp.lt.s32.totalorder %s23, 0
        %s197 = scalar_select %p196, %s23, 0
        %s198 = scalar_lea.vmem %s1, %s197
        %p199 = pneg %p77
        %p200 = pneg %p74
        %p201 = pneg %p98
        %p202 = pneg %p95
        %p203 = pneg %p119
        %p204 = pneg %p116
        %p205 = pneg %p145
        %p206 = pneg %p142
        %s207 = sand.u32 %s132, 1
        %s208 = scalar_lea.sflag [#allocation3], %s207
        %s209 = sand.u32 %s132, 1
        %s210 = smul.addr %s209, 8
        %s211 = scalar_lea.vmem [#allocation2], %s210
        %p212 = scmp.lt.s32.totalorder %s23, 0
        %s213 = scalar_select %p212, %s23, 0
        %s214 = smul.addr %s213, 4
        %s215 = scalar_lea.vmem %s0, %s214
        %p216 = scmp.lt.s32.totalorder %s23, 0
        %s217 = scalar_select %p216, %s23, 0
        %s218 = scalar_lea.vmem %s1, %s217
        %p220 = scmp.eq.s32.totalorder %s23, 0
        // Predicated region
        $region37: #{triangle_update.3} parent=35 // pred_check
          %p221 = pneg %p220
        $region38: #{triangle_update.3} parent=35 // pred_check_branch
          %223 = sbr.rel (%p221) target = $region40
        $region39: #{triangle_update.3} parent=35 // pred_region
          %224 = vst [vmem:[%s211] sm:$0xff] 0.0
        $region40: #{triangle_update.3} parent=35 // pred_fallthru
          _
        %v225 = vlaneseq
        %v226 = vshrl.u32 %v225, 7
        %s227 = smul.u32 %s22, 8
        %v228 = vstv %s227
        %v229 = vadd.s32 %v226, %v228
        %v230 = vld [vmem:[%s218] sm:$0x1]
        %v231 = vlaneseq
        %v232 = vshrl.u32 %v231, 7
        %v233 = vsub.s32 0, %v232
        %v234 = vrot.slane %v230, %v233
        %vm235 = vcmp.eq.s32.totalorder %v229, %v234
        %v236 = vsel %vm235, 1, 0
        %v237 = vcvt.s32.f32 %v236
        %v238 = vpack.c.bf16 %v237, %v237
        %v239 = vld [vmem:[%s211] sm:$0xff]
        %v240 = vld [vmem:[%s215] sm:$0xf]
        %vm241 = vcmask 64512
        %v243 = vsel %vm241, %v238, 0
        %vm245 = vcmask 1043456
        %v247 = vsel %vm245, %v240, 0
        %249 = vmatprep.subr.bf16.mxu0 0
        %250 = vmatpush1.bf16.msra.mxu0 0
        %251 = vmatprep.subr.bf16.mxu0 0
        %252 = vmatpush1.bf16.msra.mxu0 0
        %253 = vmatprep.subr.bf16.mxu0 0
        %254 = vmatpush1.bf16.msra.mxu0 0
        %255 = vmatprep.subr.bf16.mxu0 0
        %256 = vmatpush1.bf16.msra.mxu0 0
        %257 = vmatprep.subr.bf16.mxu0 0
        %258 = vmatpush1.bf16.msra.mxu0 0
        %259 = vmatprep.subr.bf16.mxu0 0
        %260 = vmatpush1.bf16.msra.mxu0 0
        %261 = vmatprep.subr.bf16.mxu0 0
        %262 = vmatpush1.bf16.msra.mxu0 0
        %263 = vmatprep.subr.bf16.mxu0 0
        %264 = vmatpush1.bf16.msra.mxu0 %v247
        %265 = vmatprep.subr.bf16.mxu0 0
        %266 = vmatpush2.bf16.msra.mxu0 0
        %267 = vmatprep.subr.bf16.mxu0 0
        %268 = vmatpush2.bf16.msra.mxu0 0
        %269 = vmatprep.subr.bf16.mxu0 0
        %270 = vmatpush2.bf16.msra.mxu0 0
        %271 = vmatprep.subr.bf16.mxu0 0
        %272 = vmatpush2.bf16.msra.mxu0 0
        %273 = vmatprep.subr.bf16.mxu0 0
        %274 = vmatpush2.bf16.msra.mxu0 0
        %275 = vmatprep.subr.bf16.mxu0 0
        %276 = vmatpush2.bf16.msra.mxu0 0
        %277 = vmatprep.subr.bf16.mxu0 0
        %278 = vmatpush2.bf16.msra.mxu0 0
        %279 = vmatprep.subr.bf16.mxu0 0
        %280 = vmatpush2.bf16.msra.mxu0 0
        %281 = vmatprep.mubr.bf16.mxu0 0
        %282 = vmatmul.mubr.bf16.gmra.mxu0 %v243
        %v283 = vpop.f32.mrf.mxu0
        %v284 = vadd.f32 0.0, %v283
        %v285 = vpop.f32.mrf.mxu0
        %v286 = vpop.f32.mrf.mxu0
        %v287 = vpop.f32.mrf.mxu0
        %288 = vdwg.mxu0
        %v289 = vadd.f32 %v239, %v284
        %290 = vst [vmem:[%s211] sm:$0xff] %v289
        // Predicated region
        $region41: #{triangle_update.3} parent=35 // pred_check
          %p291 = pneg %p220
        $region42: #{triangle_update.3} parent=35 // pred_check_branch
          %293 = sbr.rel (%p291) target = $region44
        $region43: #{triangle_update.3} parent=35 // pred_region
          %v294 = vld [vmem:[%s211] sm:$0xff]
          %v295 = vmax.f32 %v294, 1.0
          %297 = vset.pattern.permute.xlu0 127
          %298 = vperm.xlu0 %297, %v295
          %v299 = vpop.permute.xlu0 %298
          %v301 = vrcp.pop %v299
          %v302 = vmul.f32 %v294, %v301
          %v303 = vlaneseq
          %v304 = vand.u32 %v303, 127
          %vm305 = vcmp.lt.s32.totalorder %v304, 32
          %v306 = vsel %vm305, %v302, 0.0
          %307 = vadd.xlane.f32.xlu0 %v306
          %v308 = vpop.xlane.xlu0 %307
          %v309 = vmul.f32 %v308, 0.03125
          %v310 = vsub.f32 %v306, %v309
          %v311 = vsel %vm305, %v310, 0.0
          %v312 = vmul.f32 %v311, %v311
          %313 = vadd.xlane.f32.xlu0 %v312
          %v314 = vpop.xlane.xlu0 %313
          %v315 = vmul.f32 %v314, 0.03125
          %v316 = vadd.f32 %v315, 1e-05
          %v317 = vrsqrt.pop %v316
          %v318 = vmul.f32 %v311, %v317
          %v319 = vld [vmem:[%s2] sm:$0x1]
          %v321 = vlaneseq
          %v322 = vshrl.u32 %v321, 7
          %v323 = vsub.s32 0, %v322
          %v324 = vrot.slane %v319, %v323
          %v326 = vmul.f32 %v318, %v324
          %v327 = vld [vmem:[%s3] sm:$0x1]
          %v329 = vlaneseq
          %v330 = vshrl.u32 %v329, 7
          %v331 = vsub.s32 0, %v330
          %v332 = vrot.slane %v327, %v331
          %v334 = vadd.f32 %v326, %v332
          %335 = vst [vmem:[%s211] sm:$0xff] %v334
        $region44: #{triangle_update.3} parent=35 // pred_fallthru
          _
        %s336 = sand.u32 %s132, 1
        %s337 = scalar_lea.sflag [#allocation3], %s336
        %s338 = sand.u32 %s132, 1
        %s339 = smul.addr %s338, 8
        %s340 = scalar_lea.vmem [#allocation2], %s339
        // Predicated region
        $region45: #{triangle_update.3} parent=35 // pred_check
          %p341 = pneg %p142
        $region46: #{triangle_update.3} parent=35 // pred_check_branch
          %343 = sbr.rel (%p341) target = $region48
        $region47: #{triangle_update.3} parent=35 // pred_region
          %s345 = ssub.s32 128, 128
          %346 = vsyncadd %s337, %s345
          %s347 = smul.addr %s22, 128
          %s348 = scalar_lea.hbm %s4, %s347
          %s350 = sshll.u32 %s340, 4
          %s351 = int_to_ptr.vmem [resolvable:$true] %s350
          %353 = dma.vmem_to_hbm [thread:$0]  %s351, 128, %s348, %s337
        $region48: #{triangle_update.3} parent=35 // pred_fallthru
          _
      $region36: #{triangle_update.3} parent=5 // pred_fallthru
        _
      %p354 = scmp.le.s32.totalorder 2, %s13
      // Predicated region
      $region49: #{triangle_update.3} parent=5 // pred_check
        %p355 = pneg %p354
      $region50: #{triangle_update.3} parent=5 // pred_check_branch
        %357 = sbr.rel (%p355) target = $region52
      $region51: #{triangle_update.3} parent=5 // pred_region
        %s358 = ssub.s32 %s13, 2
        // Predicated region
        $region53: #{triangle_update.3} parent=51 // pred_check
          %p359 = pneg %p148
        $region54: #{triangle_update.3} parent=51 // pred_check_branch
          %361 = sbr.rel (%p359) target = $region56
        $region55: #{triangle_update.3} parent=51 // pred_region
          %s362 = sand.u32 %s133, 1
          %s363 = scalar_lea.sflag [#allocation3], %s362
          %s364 = sand.u32 %s133, 1
          %s365 = smul.addr %s364, 8
          %s366 = scalar_lea.vmem [#allocation2], %s365
          %367 = dma.done %s363, 128
        $region56: #{triangle_update.3} parent=51 // pred_fallthru
          _
      $region52: #{triangle_update.3} parent=5 // pred_fallthru
        _
    $region6: #{triangle_update.3} parent=1 // loop_footer
      %s17 = sadd.s32 1, %s13
    $region7: #{triangle_update.3} parent=1 // loop_footer_branch
      %12 = sbr.rel target = $region3
    $region8: #{triangle_update.3} parent=1 // loop_exit
      _
    %368 = vsyncpa [#allocation3], 1
    %s369 = scalar_lea.sflag [#allocation3], 1
    %370 = vsyncpa %s369, 1

// kernel: triangle_update.2
$region0: #{triangle_update.2}
  #allocation0 [shape = 'u32[]', space=smem, size = 0x4, offset = 0x4, fixed_abs, tag = 'smem constant byte address 0x4 - core index']
  #allocation1 [shape = 'u32[144,128]{1,0:T(1,128)}', space=vmem, size = 0x12000, scoped, tag = 'internal scratch']
  %s0 = inlined_call_operand.vmem [shape: s32[8,3], index: 0, kind: input, shape index: {}]
  %s1 = inlined_call_operand.vmem [shape: bf16[16,128], index: 1, kind: input, shape index: {}]
  %s2 = inlined_call_operand.vmem [shape: bf16[3,128,128], index: 2, kind: input, shape index: {}]
  %s3 = inlined_call_operand.vmem [shape: f32[1,128], index: 3, kind: input, shape index: {}]
  %s4 = inlined_call_operand.vmem [shape: bf16[8,128], index: 4, kind: output, shape index: {}]
  %s5 = sld [smem:[#allocation0]]
  $region26: #{triangle_update.2} parent=0
    _
  %s7 = ssub.s32 1, %s5
  %s8 = scalar_select 0, %s7, %s5
  // Predicated region
  $region2: #{triangle_update.2} parent=0 // pred_check
    _
  $region3: #{triangle_update.2} parent=0 // pred_check_branch
    %10 = sbr.rel (0) target = $region5
  $region4: #{triangle_update.2} parent=0 // pred_region
    _
  $region5: #{triangle_update.2} parent=0 // pred_fallthru
    _
  // Predicated region
  $region6: #{triangle_update.2} parent=0 // pred_check
    _
  $region7: #{triangle_update.2} parent=0 // pred_check_branch
    %12 = sbr.rel (0) target = $region9
  $region8: #{triangle_update.2} parent=0 // pred_region
    _
  $region9: #{triangle_update.2} parent=0 // pred_fallthru
    _
  // Predicated region
  $region10: #{triangle_update.2} parent=0 // pred_check
    _
  $region11: #{triangle_update.2} parent=0 // pred_check_branch
    %14 = sbr.rel (0) target = $region13
  $region12: #{triangle_update.2} parent=0 // pred_region
    _
  $region13: #{triangle_update.2} parent=0 // pred_fallthru
    _
  // Predicated region
  $region14: #{triangle_update.2} parent=0 // pred_check
    _
  $region15: #{triangle_update.2} parent=0 // pred_check_branch
    %16 = sbr.rel (0) target = $region17
  $region16: #{triangle_update.2} parent=0 // pred_region
    _
  $region17: #{triangle_update.2} parent=0 // pred_fallthru
    _
  %v18 = vld [vmem:[%s0] sm:$0xff]
  %v19 = vld [vmem:[%s1] sm:$0xf]
  %v20 = vld [vmem:[%s1 + $0x4] sm:$0xf]
  %v21 = vlaneseq
  %v22 = vand.u32 %v21, 127
  %23 = vset.pattern.permute.xlu0 0
  %24 = vperm.xlu0 %23, %v18
  %v25 = vpop.permute.xlu0 %24
  %vm26 = vcmp.eq.s32.totalorder %v25, %v22
  %v27 = vsel %vm26, 1, 0
  %v28 = vcvt.s32.f32 %v27
  %v29 = vpack.c.bf16 %v28, %v28
  %v32 = vunpack.c.l.b16 %v19
  %v33 = vunpack.c.l.b16 %v20
  %v34 = vpack.c.b16 %v33, %v32
  %vm36 = vcmask 130048
  %v38 = vsel %vm36, %v29, 0
  %40 = vmatprep.subr.bf16.mxu0 0
  %41 = vmatpush1.bf16.msra.mxu0 0
  %42 = vmatprep.subr.bf16.mxu0 0
  %43 = vmatpush1.bf16.msra.mxu0 0
  %44 = vmatprep.subr.bf16.mxu0 0
  %45 = vmatpush1.bf16.msra.mxu0 0
  %46 = vmatprep.subr.bf16.mxu0 0
  %47 = vmatpush1.bf16.msra.mxu0 0
  %48 = vmatprep.subr.bf16.mxu0 0
  %49 = vmatpush1.bf16.msra.mxu0 0
  %50 = vmatprep.subr.bf16.mxu0 0
  %51 = vmatpush1.bf16.msra.mxu0 0
  %52 = vmatprep.subr.bf16.mxu0 0
  %53 = vmatpush1.bf16.msra.mxu0 0
  %54 = vmatprep.subr.bf16.mxu0 0
  %55 = vmatpush1.bf16.msra.mxu0 %v34
  %56 = vmatprep.subr.bf16.mxu0 0
  %57 = vmatpush2.bf16.msra.mxu0 0
  %58 = vmatprep.subr.bf16.mxu0 0
  %59 = vmatpush2.bf16.msra.mxu0 0
  %60 = vmatprep.subr.bf16.mxu0 0
  %61 = vmatpush2.bf16.msra.mxu0 0
  %62 = vmatprep.subr.bf16.mxu0 0
  %63 = vmatpush2.bf16.msra.mxu0 0
  %64 = vmatprep.subr.bf16.mxu0 0
  %65 = vmatpush2.bf16.msra.mxu0 0
  %66 = vmatprep.subr.bf16.mxu0 0
  %67 = vmatpush2.bf16.msra.mxu0 0
  %68 = vmatprep.subr.bf16.mxu0 0
  %69 = vmatpush2.bf16.msra.mxu0 0
  %70 = vmatprep.subr.bf16.mxu0 0
  %71 = vmatpush2.bf16.msra.mxu0 0
  %72 = vmatprep.mubr.bf16.mxu0 0
  %73 = vmatmul.mubr.bf16.gmra.mxu0 %v38
  %v74 = vpop.f32.mrf.mxu0
  %v75 = vadd.f32 0.0, %v74
  %v76 = vpop.f32.mrf.mxu0
  %v77 = vpop.f32.mrf.mxu0
  %v78 = vpop.f32.mrf.mxu0
  %79 = vdwg.mxu0
  %v80 = vpack.c.bf16 %v75, %v75
  %v81 = vld [vmem:[%s2] sm:$0xf]
  %v82 = vld [vmem:[%s2 + $0x4] sm:$0xf]
  %v83 = vld [vmem:[%s2 + $0x8] sm:$0xf]
  %v84 = vld [vmem:[%s2 + $0xc] sm:$0xf]
  %v85 = vld [vmem:[%s2 + $0x10] sm:$0xf]
  %v86 = vld [vmem:[%s2 + $0x14] sm:$0xf]
  %v87 = vld [vmem:[%s2 + $0x18] sm:$0xf]
  %v88 = vld [vmem:[%s2 + $0x1c] sm:$0xf]
  %v89 = vld [vmem:[%s2 + $0x20] sm:$0xf]
  %v90 = vld [vmem:[%s2 + $0x24] sm:$0xf]
  %v91 = vld [vmem:[%s2 + $0x28] sm:$0xf]
  %v92 = vld [vmem:[%s2 + $0x2c] sm:$0xf]
  %v93 = vld [vmem:[%s2 + $0x30] sm:$0xf]
  %v94 = vld [vmem:[%s2 + $0x34] sm:$0xf]
  %v95 = vld [vmem:[%s2 + $0x38] sm:$0xf]
  %v96 = vld [vmem:[%s2 + $0x3c] sm:$0xf]
  %97 = vset.pattern.permute.xlu0 1
  %98 = vperm.xlu0 %97, %v18
  %v99 = vpop.permute.xlu0 %98
  %vm100 = vcmp.eq.s32.totalorder %v99, %v22
  %v101 = vsel %vm100, 1, 0
  %v102 = vcvt.s32.f32 %v101
  %v103 = vpack.c.bf16 %v102, %v102
  %v105 = vsel %vm36, %v103, 0
  %107 = vmatprep.subr.bf16.mxu0 0
  %108 = vmatpush1.bf16.msra.mxu0 0
  %109 = vmatprep.subr.bf16.mxu0 0
  %110 = vmatpush1.bf16.msra.mxu0 0
  %111 = vmatprep.subr.bf16.mxu0 0
  %112 = vmatpush1.bf16.msra.mxu0 0
  %113 = vmatprep.subr.bf16.mxu0 0
  %114 = vmatpush1.bf16.msra.mxu0 0
  %115 = vmatprep.subr.bf16.mxu0 0
  %116 = vmatpush1.bf16.msra.mxu0 0
  %117 = vmatprep.subr.bf16.mxu0 0
  %118 = vmatpush1.bf16.msra.mxu0 0
  %119 = vmatprep.subr.bf16.mxu0 0
  %120 = vmatpush1.bf16.msra.mxu0 0
  %121 = vmatprep.subr.bf16.mxu0 0
  %122 = vmatpush1.bf16.msra.mxu0 %v34
  %123 = vmatprep.subr.bf16.mxu0 0
  %124 = vmatpush2.bf16.msra.mxu0 0
  %125 = vmatprep.subr.bf16.mxu0 0
  %126 = vmatpush2.bf16.msra.mxu0 0
  %127 = vmatprep.subr.bf16.mxu0 0
  %128 = vmatpush2.bf16.msra.mxu0 0
  %129 = vmatprep.subr.bf16.mxu0 0
  %130 = vmatpush2.bf16.msra.mxu0 0
  %131 = vmatprep.subr.bf16.mxu0 0
  %132 = vmatpush2.bf16.msra.mxu0 0
  %133 = vmatprep.subr.bf16.mxu0 0
  %134 = vmatpush2.bf16.msra.mxu0 0
  %135 = vmatprep.subr.bf16.mxu0 0
  %136 = vmatpush2.bf16.msra.mxu0 0
  %137 = vmatprep.subr.bf16.mxu0 0
  %138 = vmatpush2.bf16.msra.mxu0 0
  %139 = vmatprep.mubr.bf16.mxu0 0
  %140 = vmatmul.mubr.bf16.gmra.mxu0 %v105
  %v141 = vpop.f32.mrf.mxu0
  %v142 = vadd.f32 0.0, %v141
  %v143 = vpop.f32.mrf.mxu0
  %v144 = vpop.f32.mrf.mxu0
  %v145 = vpop.f32.mrf.mxu0
  %146 = vdwg.mxu0
  %v147 = vpack.c.bf16 %v142, %v142
  %s148 = scalar_lea.vmem %s2, 64
  %v149 = vld [vmem:[%s148] sm:$0xf]
  %v150 = vld [vmem:[%s148 + $0x4] sm:$0xf]
  %v151 = vld [vmem:[%s148 + $0x8] sm:$0xf]
  %v152 = vld [vmem:[%s148 + $0xc] sm:$0xf]
  %v153 = vld [vmem:[%s148 + $0x10] sm:$0xf]
  %v154 = vld [vmem:[%s148 + $0x14] sm:$0xf]
  %v155 = vld [vmem:[%s148 + $0x18] sm:$0xf]
  %v156 = vld [vmem:[%s148 + $0x1c] sm:$0xf]
  %v157 = vld [vmem:[%s148 + $0x20] sm:$0xf]
  %v158 = vld [vmem:[%s148 + $0x24] sm:$0xf]
  %v159 = vld [vmem:[%s148 + $0x28] sm:$0xf]
  %v160 = vld [vmem:[%s148 + $0x2c] sm:$0xf]
  %v161 = vld [vmem:[%s148 + $0x30] sm:$0xf]
  %v162 = vld [vmem:[%s148 + $0x34] sm:$0xf]
  %v163 = vld [vmem:[%s148 + $0x38] sm:$0xf]
  %v164 = vld [vmem:[%s148 + $0x3c] sm:$0xf]
  %v181 = vunpack.c.l.b16 %v149
  %v182 = vunpack.c.l.b16 %v150
  %v183 = vunpack.c.l.b16 %v151
  %v184 = vunpack.c.l.b16 %v152
  %v185 = vunpack.c.l.b16 %v153
  %v186 = vunpack.c.l.b16 %v154
  %v187 = vunpack.c.l.b16 %v155
  %v188 = vunpack.c.l.b16 %v156
  %v189 = vunpack.c.l.b16 %v157
  %v190 = vunpack.c.l.b16 %v158
  %v191 = vunpack.c.l.b16 %v159
  %v192 = vunpack.c.l.b16 %v160
  %v193 = vunpack.c.l.b16 %v161
  %v194 = vunpack.c.l.b16 %v162
  %v195 = vunpack.c.l.b16 %v163
  %v196 = vunpack.c.l.b16 %v164
  %v197 = vpack.c.b16 %v182, %v181
  %v198 = vpack.c.b16 %v184, %v183
  %v199 = vpack.c.b16 %v186, %v185
  %v200 = vpack.c.b16 %v188, %v187
  %v201 = vpack.c.b16 %v190, %v189
  %v202 = vpack.c.b16 %v192, %v191
  %v203 = vpack.c.b16 %v194, %v193
  %v204 = vpack.c.b16 %v196, %v195
  %213 = vmatprep.subr.bf16.mxu0 0
  %214 = vmatpush1.bf16.msra.mxu0 %v204
  %215 = vmatprep.subr.bf16.mxu0 0
  %216 = vmatpush1.bf16.msra.mxu0 %v203
  %217 = vmatprep.subr.bf16.mxu0 0
  %218 = vmatpush1.bf16.msra.mxu0 %v202
  %219 = vmatprep.subr.bf16.mxu0 0
  %220 = vmatpush1.bf16.msra.mxu0 %v201
  %221 = vmatprep.subr.bf16.mxu0 0
  %222 = vmatpush1.bf16.msra.mxu0 %v200
  %223 = vmatprep.subr.bf16.mxu0 0
  %224 = vmatpush1.bf16.msra.mxu0 %v199
  %225 = vmatprep.subr.bf16.mxu0 0
  %226 = vmatpush1.bf16.msra.mxu0 %v198
  %227 = vmatprep.subr.bf16.mxu0 0
  %228 = vmatpush1.bf16.msra.mxu0 %v197
  %229 = vmatprep.subr.bf16.mxu0 0
  %230 = vmatpush2.bf16.msra.mxu0 0
  %231 = vmatprep.subr.bf16.mxu0 0
  %232 = vmatpush2.bf16.msra.mxu0 0
  %233 = vmatprep.subr.bf16.mxu0 0
  %234 = vmatpush2.bf16.msra.mxu0 0
  %235 = vmatprep.subr.bf16.mxu0 0
  %236 = vmatpush2.bf16.msra.mxu0 0
  %237 = vmatprep.subr.bf16.mxu0 0
  %238 = vmatpush2.bf16.msra.mxu0 0
  %239 = vmatprep.subr.bf16.mxu0 0
  %240 = vmatpush2.bf16.msra.mxu0 0
  %241 = vmatprep.subr.bf16.mxu0 0
  %242 = vmatpush2.bf16.msra.mxu0 0
  %243 = vmatprep.subr.bf16.mxu0 0
  %244 = vmatpush2.bf16.msra.mxu0 0
  %245 = vmatprep.mubr.bf16.mxu0 0
  %246 = vmatmul.mubr.bf16.gmra.mxu0 %v147
  %v247 = vpop.f32.mrf.mxu0
  %v248 = vadd.f32 0.0, %v247
  %v249 = vpop.f32.mrf.mxu0
  %v250 = vpop.f32.mrf.mxu0
  %v251 = vpop.f32.mrf.mxu0
  %252 = vdwg.mxu0
  %v269 = vunpack.c.l.b16 %v81
  %v270 = vunpack.c.l.b16 %v82
  %v271 = vunpack.c.l.b16 %v83
  %v272 = vunpack.c.l.b16 %v84
  %v273 = vunpack.c.l.b16 %v85
  %v274 = vunpack.c.l.b16 %v86
  %v275 = vunpack.c.l.b16 %v87
  %v276 = vunpack.c.l.b16 %v88
  %v277 = vunpack.c.l.b16 %v89
  %v278 = vunpack.c.l.b16 %v90
  %v279 = vunpack.c.l.b16 %v91
  %v280 = vunpack.c.l.b16 %v92
  %v281 = vunpack.c.l.b16 %v93
  %v282 = vunpack.c.l.b16 %v94
  %v283 = vunpack.c.l.b16 %v95
  %v284 = vunpack.c.l.b16 %v96
  %v285 = vpack.c.b16 %v270, %v269
  %v286 = vpack.c.b16 %v272, %v271
  %v287 = vpack.c.b16 %v274, %v273
  %v288 = vpack.c.b16 %v276, %v275
  %v289 = vpack.c.b16 %v278, %v277
  %v290 = vpack.c.b16 %v280, %v279
  %v291 = vpack.c.b16 %v282, %v281
  %v292 = vpack.c.b16 %v284, %v283
  %301 = vmatprep.subr.bf16.mxu0 0
  %302 = vmatpush1.bf16.msra.mxu0 %v292
  %303 = vmatprep.subr.bf16.mxu0 0
  %304 = vmatpush1.bf16.msra.mxu0 %v291
  %305 = vmatprep.subr.bf16.mxu0 0
  %306 = vmatpush1.bf16.msra.mxu0 %v290
  %307 = vmatprep.subr.bf16.mxu0 0
  %308 = vmatpush1.bf16.msra.mxu0 %v289
  %309 = vmatprep.subr.bf16.mxu0 0
  %310 = vmatpush1.bf16.msra.mxu0 %v288
  %311 = vmatprep.subr.bf16.mxu0 0
  %312 = vmatpush1.bf16.msra.mxu0 %v287
  %313 = vmatprep.subr.bf16.mxu0 0
  %314 = vmatpush1.bf16.msra.mxu0 %v286
  %315 = vmatprep.subr.bf16.mxu0 0
  %316 = vmatpush1.bf16.msra.mxu0 %v285
  %317 = vmatprep.subr.bf16.mxu0 0
  %318 = vmatpush2.bf16.msra.mxu0 0
  %319 = vmatprep.subr.bf16.mxu0 0
  %320 = vmatpush2.bf16.msra.mxu0 0
  %321 = vmatprep.subr.bf16.mxu0 0
  %322 = vmatpush2.bf16.msra.mxu0 0
  %323 = vmatprep.subr.bf16.mxu0 0
  %324 = vmatpush2.bf16.msra.mxu0 0
  %325 = vmatprep.subr.bf16.mxu0 0
  %326 = vmatpush2.bf16.msra.mxu0 0
  %327 = vmatprep.subr.bf16.mxu0 0
  %328 = vmatpush2.bf16.msra.mxu0 0
  %329 = vmatprep.subr.bf16.mxu0 0
  %330 = vmatpush2.bf16.msra.mxu0 0
  %331 = vmatprep.subr.bf16.mxu0 0
  %332 = vmatpush2.bf16.msra.mxu0 0
  %333 = vmatprep.mubr.bf16.mxu0 0
  %334 = vmatmul.mubr.bf16.gmra.mxu0 %v80
  %v335 = vpop.f32.mrf.mxu0
  %v336 = vadd.f32 %v248, %v335
  %v337 = vpop.f32.mrf.mxu0
  %v338 = vpop.f32.mrf.mxu0
  %v339 = vpop.f32.mrf.mxu0
  %340 = vdwg.mxu0
  %341 = vset.pattern.permute.xlu0 2
  %342 = vperm.xlu0 %341, %v18
  %v343 = vpop.permute.xlu0 %342
  %vm344 = vcmp.eq.s32.totalorder %v343, %v22
  %v345 = vsel %vm344, 1, 0
  %v346 = vcvt.s32.f32 %v345
  %v347 = vpack.c.bf16 %v346, %v346
  %v349 = vsel %vm36, %v347, 0
  %351 = vmatprep.subr.bf16.mxu0 0
  %352 = vmatpush1.bf16.msra.mxu0 0
  %353 = vmatprep.subr.bf16.mxu0 0
  %354 = vmatpush1.bf16.msra.mxu0 0
  %355 = vmatprep.subr.bf16.mxu0 0
  %356 = vmatpush1.bf16.msra.mxu0 0
  %357 = vmatprep.subr.bf16.mxu0 0
  %358 = vmatpush1.bf16.msra.mxu0 0
  %359 = vmatprep.subr.bf16.mxu0 0
  %360 = vmatpush1.bf16.msra.mxu0 0
  %361 = vmatprep.subr.bf16.mxu0 0
  %362 = vmatpush1.bf16.msra.mxu0 0
  %363 = vmatprep.subr.bf16.mxu0 0
  %364 = vmatpush1.bf16.msra.mxu0 0
  %365 = vmatprep.subr.bf16.mxu0 0
  %366 = vmatpush1.bf16.msra.mxu0 %v34
  %367 = vmatprep.subr.bf16.mxu0 0
  %368 = vmatpush2.bf16.msra.mxu0 0
  %369 = vmatprep.subr.bf16.mxu0 0
  %370 = vmatpush2.bf16.msra.mxu0 0
  %371 = vmatprep.subr.bf16.mxu0 0
  %372 = vmatpush2.bf16.msra.mxu0 0
  %373 = vmatprep.subr.bf16.mxu0 0
  %374 = vmatpush2.bf16.msra.mxu0 0
  %375 = vmatprep.subr.bf16.mxu0 0
  %376 = vmatpush2.bf16.msra.mxu0 0
  %377 = vmatprep.subr.bf16.mxu0 0
  %378 = vmatpush2.bf16.msra.mxu0 0
  %379 = vmatprep.subr.bf16.mxu0 0
  %380 = vmatpush2.bf16.msra.mxu0 0
  %381 = vmatprep.subr.bf16.mxu0 0
  %382 = vmatpush2.bf16.msra.mxu0 0
  %383 = vmatprep.mubr.bf16.mxu0 0
  %384 = vmatmul.mubr.bf16.gmra.mxu0 %v349
  %v385 = vpop.f32.mrf.mxu0
  %v386 = vadd.f32 0.0, %v385
  %v387 = vpop.f32.mrf.mxu0
  %v388 = vpop.f32.mrf.mxu0
  %v389 = vpop.f32.mrf.mxu0
  %390 = vdwg.mxu0
  %v391 = vpack.c.bf16 %v386, %v386
  %s392 = scalar_lea.vmem %s2, 128
  %v393 = vld [vmem:[%s392] sm:$0xf]
  %v394 = vld [vmem:[%s392 + $0x4] sm:$0xf]
  %v395 = vld [vmem:[%s392 + $0x8] sm:$0xf]
  %v396 = vld [vmem:[%s392 + $0xc] sm:$0xf]
  %v397 = vld [vmem:[%s392 + $0x10] sm:$0xf]
  %v398 = vld [vmem:[%s392 + $0x14] sm:$0xf]
  %v399 = vld [vmem:[%s392 + $0x18] sm:$0xf]
  %v400 = vld [vmem:[%s392 + $0x1c] sm:$0xf]
  %v401 = vld [vmem:[%s392 + $0x20] sm:$0xf]
  %v402 = vld [vmem:[%s392 + $0x24] sm:$0xf]
  %v403 = vld [vmem:[%s392 + $0x28] sm:$0xf]
  %v404 = vld [vmem:[%s392 + $0x2c] sm:$0xf]
  %v405 = vld [vmem:[%s392 + $0x30] sm:$0xf]
  %v406 = vld [vmem:[%s392 + $0x34] sm:$0xf]
  %v407 = vld [vmem:[%s392 + $0x38] sm:$0xf]
  %v408 = vld [vmem:[%s392 + $0x3c] sm:$0xf]
  %v425 = vunpack.c.l.b16 %v393
  %v426 = vunpack.c.l.b16 %v394
  %v427 = vunpack.c.l.b16 %v395
  %v428 = vunpack.c.l.b16 %v396
  %v429 = vunpack.c.l.b16 %v397
  %v430 = vunpack.c.l.b16 %v398
  %v431 = vunpack.c.l.b16 %v399
  %v432 = vunpack.c.l.b16 %v400
  %v433 = vunpack.c.l.b16 %v401
  %v434 = vunpack.c.l.b16 %v402
  %v435 = vunpack.c.l.b16 %v403
  %v436 = vunpack.c.l.b16 %v404
  %v437 = vunpack.c.l.b16 %v405
  %v438 = vunpack.c.l.b16 %v406
  %v439 = vunpack.c.l.b16 %v407
  %v440 = vunpack.c.l.b16 %v408
  %v441 = vpack.c.b16 %v426, %v425
  %v442 = vpack.c.b16 %v428, %v427
  %v443 = vpack.c.b16 %v430, %v429
  %v444 = vpack.c.b16 %v432, %v431
  %v445 = vpack.c.b16 %v434, %v433
  %v446 = vpack.c.b16 %v436, %v435
  %v447 = vpack.c.b16 %v438, %v437
  %v448 = vpack.c.b16 %v440, %v439
  %457 = vmatprep.subr.bf16.mxu0 0
  %458 = vmatpush1.bf16.msra.mxu0 %v448
  %459 = vmatprep.subr.bf16.mxu0 0
  %460 = vmatpush1.bf16.msra.mxu0 %v447
  %461 = vmatprep.subr.bf16.mxu0 0
  %462 = vmatpush1.bf16.msra.mxu0 %v446
  %463 = vmatprep.subr.bf16.mxu0 0
  %464 = vmatpush1.bf16.msra.mxu0 %v445
  %465 = vmatprep.subr.bf16.mxu0 0
  %466 = vmatpush1.bf16.msra.mxu0 %v444
  %467 = vmatprep.subr.bf16.mxu0 0
  %468 = vmatpush1.bf16.msra.mxu0 %v443
  %469 = vmatprep.subr.bf16.mxu0 0
  %470 = vmatpush1.bf16.msra.mxu0 %v442
  %471 = vmatprep.subr.bf16.mxu0 0
  %472 = vmatpush1.bf16.msra.mxu0 %v441
  %473 = vmatprep.subr.bf16.mxu0 0
  %474 = vmatpush2.bf16.msra.mxu0 0
  %475 = vmatprep.subr.bf16.mxu0 0
  %476 = vmatpush2.bf16.msra.mxu0 0
  %477 = vmatprep.subr.bf16.mxu0 0
  %478 = vmatpush2.bf16.msra.mxu0 0
  %479 = vmatprep.subr.bf16.mxu0 0
  %480 = vmatpush2.bf16.msra.mxu0 0
  %481 = vmatprep.subr.bf16.mxu0 0
  %482 = vmatpush2.bf16.msra.mxu0 0
  %483 = vmatprep.subr.bf16.mxu0 0
  %484 = vmatpush2.bf16.msra.mxu0 0
  %485 = vmatprep.subr.bf16.mxu0 0
  %486 = vmatpush2.bf16.msra.mxu0 0
  %487 = vmatprep.subr.bf16.mxu0 0
  %488 = vmatpush2.bf16.msra.mxu0 0
  %489 = vmatprep.mubr.bf16.mxu0 0
  %490 = vmatmul.mubr.bf16.gmra.mxu0 %v391
  %v491 = vpop.f32.mrf.mxu0
  %v492 = vadd.f32 0.0, %v491
  %v493 = vpop.f32.mrf.mxu0
  %v494 = vpop.f32.mrf.mxu0
  %v495 = vpop.f32.mrf.mxu0
  %496 = vdwg.mxu0
  %v497 = vadd.f32 %v336, %v492
  %v498 = vld [vmem:[%s3] sm:$0x1]
  %v500 = vlaneseq
  %v501 = vshrl.u32 %v500, 7
  %v502 = vsub.s32 0, %v501
  %v503 = vrot.slane %v498, %v502
  %v505 = vadd.f32 %v497, %v503
  %v506 = vmul.f32 %v505, 0.5
  %v507 = vmul.f32 %v505, 0.70710677
  %v508 = verf.f32.pop %v507
  %v509 = vadd.f32 %v508, 1.0
  %v510 = vmul.f32 %v506, %v509
  %vm511 = vcmp.eq.s32.totalorder %v22, 127
  %v512 = vsel %vm511, 1.0, %v510
  %v513 = vpack.c.bf16 %v512, %v512
  %514 = vst [vmem:[%s4] sm:$0xf] %v513
  // Predicated region
  $region18: #{triangle_update.2} parent=0 // pred_check
    _
  $region19: #{triangle_update.2} parent=0 // pred_check_branch
    %516 = sbr.rel (0) target = $region21
  $region20: #{triangle_update.2} parent=0 // pred_region
    _
  $region21: #{triangle_update.2} parent=0 // pred_fallthru
    _
  // Predicated region
  $region22: #{triangle_update.2} parent=0 // pred_check
    _
  $region23: #{triangle_update.2} parent=0 // pred_check_branch
    %518 = sbr.rel (0) target = $region25
  $region24: #{triangle_update.2} parent=0 // pred_region
    _
  $region25: #{triangle_update.2} parent=0 // pred_fallthru
    _

</llo_original>
